<compile_context>
chip_gen: v7x
topology: tpu7x:2x2x1
jax: 0.10.0
libtpu: 0.0.40
codegen_flags: <defaults>
</compile_context>

<pallas_src>
import functools

import jax
import jax.numpy as jnp
import numpy as np
from jax.experimental import pallas as pl
from jax.experimental.pallas import tpu as pltpu


def _round_up(x: int, m: int) -> int:
    return ((x + m - 1) // m) * m


def _cdiv(a: int, b: int) -> int:
    return (a + b - 1) // b


def _mesh_node_block_kernel(start_ref, ntiles_ref,                    # SMEM scalar prefetch
                            src_ref, node_ref, edge_ref,
                            w1n_ref, w1e_ref, b1_ref,
                            w2_ref, b2_ref, gamma_ref, beta_ref,
                            out_ref, agg_ref,
                            *, do_true, do_pad, compute_dtype):
    i = pl.program_id(0)          # node-tile index (parallel -> megacore sharding)
    k = pl.program_id(1)          # relative edge-tile index (arbitrary / reduction)
    tile_n = agg_ref.shape[0]
    tile_e = edge_ref.shape[0]

    @pl.when(k == 0)
    def _init():
        agg_ref[...] = jnp.zeros_like(agg_ref)

    # --- tiled scatter-sum over only the edge tiles that touch this node tile.
    #     One-hot is built directly in compute_dtype (0/1 exact in bf16); edge operand is
    #     already compute_dtype in HBM; accumulation stays f32 on the MXU.
    @pl.when(k < ntiles_ref[i])
    def _scatter():
        node_ids = i * tile_n + jax.lax.broadcasted_iota(jnp.int32, (tile_n, tile_e), 0)
        onehot = (node_ids == src_ref[...]).astype(compute_dtype)      # [tile_n, tile_e]
        agg_ref[...] += jnp.dot(onehot, edge_ref[...].astype(compute_dtype),
                                preferred_element_type=jnp.float32)    # [tile_n, De_p] f32

    @pl.when(k == pl.num_programs(1) - 1)
    def _finish():
        node = node_ref[...].astype(jnp.float32)                       # [tile_n, Dn_p]
        agg = agg_ref[...]                                             # [tile_n, De_p] f32

        # MeshGraphMLP: Linear(concat[node, agg]) -> SiLU -> Linear -> LayerNorm.
        # concat+Linear fused as two matmuls; operands in compute_dtype, f32 accumulate.
        h = (jnp.dot(node.astype(compute_dtype), w1n_ref[...],
                     preferred_element_type=jnp.float32)
             + jnp.dot(agg.astype(compute_dtype), w1e_ref[...],
                       preferred_element_type=jnp.float32)
             + b1_ref[...])                                            # [tile_n, H_p] f32
        h = h * jax.nn.sigmoid(h)                                      # SiLU (f32 VPU/EUP)

        y = (jnp.dot(h.astype(compute_dtype), w2_ref[...],
                     preferred_element_type=jnp.float32)
             + b2_ref[...])                                            # [tile_n, Do_p] f32

        # LayerNorm (eps=1e-5, biased variance).  Lane mask only when Do is padded.
        if do_true == do_pad:
            mean = jnp.mean(y, axis=-1, keepdims=True)
            diff = y - mean
            var = jnp.mean(diff * diff, axis=-1, keepdims=True)
        else:
            lane = jax.lax.broadcasted_iota(jnp.int32, y.shape, 1)
            mask = (lane < do_true).astype(jnp.float32)
            inv_d = 1.0 / do_true
            mean = jnp.sum(y * mask, axis=-1, keepdims=True) * inv_d
            diff = (y - mean) * mask
            var = jnp.sum(diff * diff, axis=-1, keepdims=True) * inv_d
        y = diff * jax.lax.rsqrt(var + 1e-5)
        y = y * gamma_ref[...] + beta_ref[...]

        # residual
        out_ref[...] = (y + node).astype(out_ref.dtype)


def mesh_node_block(node_features, edge_features, src_indices, params,
                    *, compute_dtype=jnp.bfloat16, tile_n=1024, tile_e=2048):
    """Pallas-backed MeshNodeBlock.forward (single-process 'sum' aggregation)."""
    N, Dn = node_features.shape
    E, De = edge_features.shape
    H = params["w1n"].shape[1]
    Do = params["w2"].shape[1]
    assert Do == Dn, "residual connection requires output_node_dim == input_node_dim"

    LANE, SUB = 128, 8
    Dn_p = _round_up(Dn, LANE)
    De_p = _round_up(De, LANE)
    H_p = _round_up(H, LANE)
    Do_p = _round_up(Do, LANE)

    # --- node tiling; prefer an even node-tile count (>1) so both v7x TCs get work.
    tile_n = min(tile_n, _round_up(N, SUB))
    n_node_tiles = _cdiv(N, tile_n)
    if n_node_tiles > 1 and n_node_tiles % 2 == 1:
        n_node_tiles += 1
        tile_n = _round_up(_cdiv(N, n_node_tiles), SUB)
        n_node_tiles = _cdiv(N, tile_n)
    N_p = n_node_tiles * tile_n

    tile_e = min(tile_e, _round_up(E, LANE))
    E_p = _round_up(E, tile_e)
    n_edge_tiles = E_p // tile_e

    # --- one-time host-side preprocessing: sort edges by src node and build the
    #     per-node-tile edge-tile ranges (mesh topology is static -> amortised).
    src_np = np.asarray(jax.device_get(src_indices)).astype(np.int64)
    assert src_np.size == 0 or (src_np.min() >= 0 and src_np.max() < N), \
        "src_indices out of range [0, N)"
    order_np = np.argsort(src_np, kind="stable")
    src_sorted_np = src_np[order_np]

    tile_ids = np.arange(n_node_tiles)
    lo = np.searchsorted(src_sorted_np, tile_ids * tile_n, side="left")
    hi = np.searchsorted(src_sorted_np, (tile_ids + 1) * tile_n, side="left")
    raw_start = lo // tile_e
    raw_end = np.where(hi > lo, -(-hi // tile_e), raw_start)           # ceil when non-empty
    ntiles_np = (raw_end - raw_start).astype(np.int32)                  # edge tiles per node tile
    start_np = np.minimum(raw_start, n_edge_tiles - 1).astype(np.int32)
    max_k = max(int(ntiles_np.max()) if ntiles_np.size else 0, 1)

    start_tile = jnp.asarray(start_np, jnp.int32)                       # scalar-prefetch (SMEM)
    ntiles = jnp.asarray(ntiles_np, jnp.int32)                          # scalar-prefetch (SMEM)

    f32 = jnp.float32
    edge_item = jnp.dtype(compute_dtype).itemsize

    # activations: node stays f32 (residual/LN); edges live in compute_dtype in HBM.
    order = jnp.asarray(order_np, jnp.int32)
    edge_sorted = jnp.take(edge_features, order, axis=0).astype(compute_dtype)
    if (E_p, De_p) == (E, De):
        edge_p = edge_sorted
    else:
        edge_p = jnp.zeros((E_p, De_p), compute_dtype).at[:E, :De].set(edge_sorted)

    node_f32 = node_features.astype(f32)
    if (N_p, Dn_p) == (N, Dn):
        node_p = node_f32
    else:
        node_p = jnp.zeros((N_p, Dn_p), f32).at[:N, :Dn].set(node_f32)

    # padded edges get an out-of-range src so they never match a node id.
    src_p = jnp.full((1, E_p), N_p, jnp.int32).at[0, :E].set(
        jnp.asarray(src_sorted_np, jnp.int32))

    def pad2(x, rows, cols, dtype):
        x = jnp.asarray(x, f32)
        if x.ndim == 1:
            x = x.reshape(1, -1)
        if x.shape == (rows, cols):
            return x.astype(dtype)
        return jnp.zeros((rows, cols), f32).at[:x.shape[0], :x.shape[1]].set(x).astype(dtype)

    w1n = pad2(params["w1n"], Dn_p, H_p, compute_dtype)
    w1e = pad2(params["w1e"], De_p, H_p, compute_dtype)
    w2 = pad2(params["w2"], H_p, Do_p, compute_dtype)
    b1 = pad2(params["b1"], 1, H_p, f32)
    b2 = pad2(params["b2"], 1, Do_p, f32)
    gamma = pad2(params["gamma"], 1, Do_p, f32)
    beta = pad2(params["beta"], 1, Do_p, f32)

    # edge-tile index for grid point (i, k): clamp past-the-end steps to the last valid
    # tile so the block index repeats and Pallas issues no extra DMA for skipped steps.
    def _edge_block(i, k, start_ref, ntiles_ref):
        last = start_ref[i] + jnp.maximum(ntiles_ref[i] - 1, 0)
        return jnp.minimum(start_ref[i] + k, last)

    in_specs = [
        pl.BlockSpec((1, tile_e), lambda i, k, s, n: (0, _edge_block(i, k, s, n))),    # src
        pl.BlockSpec((tile_n, Dn_p), lambda i, k, s, n: (i, 0)),                       # node
        pl.BlockSpec((tile_e, De_p), lambda i, k, s, n: (_edge_block(i, k, s, n), 0)), # edges
        pl.BlockSpec((Dn_p, H_p), lambda i, k, s, n: (0, 0)),                          # W1 node part
        pl.BlockSpec((De_p, H_p), lambda i, k, s, n: (0, 0)),                          # W1 edge part
        pl.BlockSpec((1, H_p), lambda i, k, s, n: (0, 0)),                             # b1
        pl.BlockSpec((H_p, Do_p), lambda i, k, s, n: (0, 0)),                          # W2
        pl.BlockSpec((1, Do_p), lambda i, k, s, n: (0, 0)),                            # b2
        pl.BlockSpec((1, Do_p), lambda i, k, s, n: (0, 0)),                            # LN gamma
        pl.BlockSpec((1, Do_p), lambda i, k, s, n: (0, 0)),                            # LN beta
    ]

    kernel = functools.partial(_mesh_node_block_kernel,
                               do_true=Do, do_pad=Do_p, compute_dtype=compute_dtype)

    # Cost estimate: only the edge tiles actually touched are streamed / scattered.
    total_scatter_tiles = int(ntiles_np.sum())
    flops = (2 * total_scatter_tiles * tile_n * tile_e * De_p          # tiled scatter matmul
             + 2 * N_p * (Dn_p + De_p) * H_p                           # first Linear (concat fused)
             + 2 * N_p * H_p * Do_p)                                   # second Linear
    w_bytes = sum(int(w.size) * int(w.dtype.itemsize)
                  for w in (w1n, w1e, w2, b1, b2, gamma, beta))
    out_itemsize = jnp.dtype(node_features.dtype).itemsize
    bytes_accessed = (node_p.size * 4
                      + total_scatter_tiles * tile_e * (De_p * edge_item + 4)
                      + w_bytes
                      + N_p * Do_p * out_itemsize)

    # VMEM budget derived from the actual tiling (double buffers + scratch + slack);
    # clamped so it stays inside v7x's 64 MiB/TC while leaving headroom.
    vmem_est = (2 * tile_n * Dn_p * 4                      # node blocks
                + 2 * tile_e * (De_p * edge_item + 4)      # edge + src blocks
                + 2 * w_bytes                              # resident weights (double-buffered)
                + 2 * tile_n * Do_p * out_itemsize         # output blocks
                + tile_n * De_p * 4                        # agg scratch
                + tile_n * tile_e * edge_item              # one-hot intermediate
                + 2 * tile_n * max(H_p, Do_p) * 4)         # h / y intermediates
    vmem_limit = int(min(max(2 * vmem_est, 32 * 1024 * 1024), 60 * 1024 * 1024))

    out_p = pl.pallas_call(
        kernel,
        out_shape=jax.ShapeDtypeStruct((N_p, Do_p), node_features.dtype),
        grid_spec=pltpu.PrefetchScalarGridSpec(
            num_scalar_prefetch=2,
            grid=(n_node_tiles, max_k),
            in_specs=in_specs,
            out_specs=pl.BlockSpec((tile_n, Do_p), lambda i, k, s, n: (i, 0)),
            scratch_shapes=[pltpu.VMEM((tile_n, De_p), jnp.float32)],  # agg accumulator
        ),
        compiler_params=pltpu.CompilerParams(
            dimension_semantics=("parallel", "arbitrary"),
            vmem_limit_bytes=vmem_limit,
        ),
        cost_estimate=pl.CostEstimate(flops=flops,
                                      transcendentals=N_p * H_p,
                                      bytes_accessed=bytes_accessed),
    )(start_tile, ntiles, src_p, node_p, edge_p, w1n, w1e, b1, w2, b2, gamma, beta)

    return out_p[:N, :Do]


def _reference(node, edge, src, params):
    """Pure-JAX f32 reference of the PyTorch forward pass (for verification)."""
    N = node.shape[0]
    agg = jnp.zeros((N, edge.shape[1]), jnp.float32).at[src].add(edge)
    h = node @ params["w1n"] + agg @ params["w1e"] + params["b1"]
    h = h * jax.nn.sigmoid(h)
    y = h @ params["w2"] + params["b2"]
    mean = jnp.mean(y, -1, keepdims=True)
    var = jnp.mean((y - mean) ** 2, -1, keepdims=True)
    y = (y - mean) / jnp.sqrt(var + 1e-5) * params["gamma"] + params["beta"]
    return y + node


if __name__ == "__main__":
    # small, self-consistent shapes
    N, E = 16, 48          # nodes, edges
    Dn, De = 16, 8         # input node dim, input edge dim
    H = 32                 # hidden dim
    Do = Dn                # output node dim (== input node dim for the residual)

    key = jax.random.PRNGKey(0)
    ks = jax.random.split(key, 10)

    node_features = jax.random.normal(ks[0], (N, Dn), jnp.float32)
    edge_features = jax.random.normal(ks[1], (E, De), jnp.float32)
    src_indices = jax.random.randint(ks[2], (E,), 0, N, jnp.int32)

    # parameters follow MeshGraphMLP(Dn+De -> H -> Do) + LayerNorm(Do); stored [in, out]
    params = {
        "w1n": jax.random.normal(ks[3], (Dn, H), jnp.float32) * 0.1,
        "w1e": jax.random.normal(ks[4], (De, H), jnp.float32) * 0.1,
        "b1":  jax.random.normal(ks[5], (1, H), jnp.float32) * 0.1,
        "w2":  jax.random.normal(ks[6], (H, Do), jnp.float32) * 0.1,
        "b2":  jax.random.normal(ks[7], (1, Do), jnp.float32) * 0.1,
        "gamma": 1.0 + 0.1 * jax.random.normal(ks[8], (1, Do), jnp.float32),
        "beta":  0.1 * jax.random.normal(ks[9], (1, Do), jnp.float32),
    }

    ref = jax.block_until_ready(
        _reference(node_features, edge_features, src_indices, params))

    # 1) f32 compute path: numerically faithful to the module, tight tolerance.
    out_f32 = jax.block_until_ready(
        mesh_node_block(node_features, edge_features, src_indices, params,
                        compute_dtype=jnp.float32))
    assert out_f32.shape == (N, Do) and out_f32.dtype == jnp.float32
    np.testing.assert_allclose(np.asarray(out_f32), np.asarray(ref), rtol=1e-4, atol=1e-4)

    # 2) bf16 matmul operands (f32 accumulate, f32 elementwise): production MXU path.
    out_bf16 = jax.block_until_ready(
        mesh_node_block(node_features, edge_features, src_indices, params,
                        compute_dtype=jnp.bfloat16))
    np.testing.assert_allclose(np.asarray(out_bf16), np.asarray(ref), rtol=5e-2, atol=5e-2)

    print("KERNEL_OK")
</pallas_src>

<mosaic_0001>
module attributes {stable_mosaic.version = 11 : i64} {
  func.func @_mesh_node_block_kernel(%arg0: i32, %arg1: i32, %arg2: memref<1xi32, #tpu.memory_space<smem>>, %arg3: memref<1xi32, #tpu.memory_space<smem>>, %arg4: memref<1x128xi32, #tpu.memory_space<vmem>>, %arg5: memref<16x128xf32, #tpu.memory_space<vmem>>, %arg6: memref<128x128xf32, #tpu.memory_space<vmem>>, %arg7: memref<128x128xf32, #tpu.memory_space<vmem>>, %arg8: memref<128x128xf32, #tpu.memory_space<vmem>>, %arg9: memref<1x128xf32, #tpu.memory_space<vmem>>, %arg10: memref<128x128xf32, #tpu.memory_space<vmem>>, %arg11: memref<1x128xf32, #tpu.memory_space<vmem>>, %arg12: memref<1x128xf32, #tpu.memory_space<vmem>>, %arg13: memref<1x128xf32, #tpu.memory_space<vmem>>, %arg14: memref<16x128xf32, #tpu.memory_space<vmem>>, %arg15: memref<16x128xf32, #tpu.memory_space<vmem>>) attributes {dimension_semantics = [#tpu.dimension_semantics<parallel>, #tpu.dimension_semantics<arbitrary>], iteration_bounds = array<i64: 1, 1>, scalar_prefetch = 2 : i64, scratch_operands = 1 : i64, tpu.core_type = #tpu.core_type<tc>, window_params = [{transform_indices = @transform_0, window_bounds = array<i64: 1, 128>}, {transform_indices = @transform_1, window_bounds = array<i64: 16, 128>}, {transform_indices = @transform_2, window_bounds = array<i64: 128, 128>}, {pipeline_mode = #tpu.pipeline_mode<synchronous>, transform_indices = @transform_3, window_bounds = array<i64: 128, 128>}, {pipeline_mode = #tpu.pipeline_mode<synchronous>, transform_indices = @transform_4, window_bounds = array<i64: 128, 128>}, {pipeline_mode = #tpu.pipeline_mode<synchronous>, transform_indices = @transform_5, window_bounds = array<i64: 1, 128>}, {pipeline_mode = #tpu.pipeline_mode<synchronous>, transform_indices = @transform_6, window_bounds = array<i64: 128, 128>}, {pipeline_mode = #tpu.pipeline_mode<synchronous>, transform_indices = @transform_7, window_bounds = array<i64: 1, 128>}, {pipeline_mode = #tpu.pipeline_mode<synchronous>, transform_indices = @transform_8, window_bounds = array<i64: 1, 128>}, {pipeline_mode = #tpu.pipeline_mode<synchronous>, transform_indices = @transform_9, window_bounds = array<i64: 1, 128>}, {transform_indices = @transform_10, window_bounds = array<i64: 16, 128>}]} {
    %c0_i32 = arith.constant 0 : i32
    %0 = arith.cmpi eq, %arg1, %c0_i32 : i32
    %1 = arith.extui %0 : i1 to i32
    %c0_i32_0 = arith.constant 0 : i32
    %2 = arith.cmpi ne, %1, %c0_i32_0 : i32
    scf.if %2 {
      %cst = arith.constant 0.000000e+00 : f32
      %11 = vector.broadcast %cst : f32 to vector<16x128xf32>
      %c0 = arith.constant 0 : index
      %c0_4 = arith.constant 0 : index
      %12 = vector.load %arg15[%c0, %c0_4] : memref<16x128xf32, #tpu.memory_space<vmem>>, vector<16x128xf32>
      tpu.vector_store %arg15[%c0, %c0_4], %11 {strides = array<i32>} : memref<16x128xf32, #tpu.memory_space<vmem>>, vector<16x128xf32>,
    } else {
    }
    %3 = arith.index_cast %arg0 : i32 to index
    %4 = memref.load %arg3[%3] : memref<1xi32, #tpu.memory_space<smem>>
    %5 = arith.cmpi slt, %arg1, %4 : i32
    %6 = arith.extui %5 : i1 to i32
    %c0_i32_1 = arith.constant 0 : i32
    %7 = arith.cmpi ne, %6, %c0_i32_1 : i32
    scf.if %7 {
      %c16_i32 = arith.constant 16 : i32
      %11 = arith.muli %arg0, %c16_i32 : i32
      %12 = tpu.iota {dimensions = array<i32: 0>} : vector<16x128xi32>
      %13 = vector.broadcast %11 : i32 to vector<16x128xi32>
      %14 = arith.addi %13, %12 : vector<16x128xi32>
      %c0 = arith.constant 0 : index
      %c0_4 = arith.constant 0 : index
      %15 = vector.load %arg4[%c0, %c0_4] : memref<1x128xi32, #tpu.memory_space<vmem>>, vector<1x128xi32>
      %16 = vector.broadcast %15 : vector<1x128xi32> to vector<16x128xi32>
      %17 = arith.cmpi eq, %14, %16 : vector<16x128xi32>
      %18 = arith.extui %17 : vector<16x128xi1> to vector<16x128xi32>
      %19 = arith.sitofp %18 : vector<16x128xi32> to vector<16x128xf32>
      %c0_5 = arith.constant 0 : index
      %c0_6 = arith.constant 0 : index
      %20 = vector.load %arg15[%c0_5, %c0_6] : memref<16x128xf32, #tpu.memory_space<vmem>>, vector<16x128xf32>
      %c0_7 = arith.constant 0 : index
      %c0_8 = arith.constant 0 : index
      %21 = vector.load %arg6[%c0_7, %c0_8] : memref<128x128xf32, #tpu.memory_space<vmem>>, vector<128x128xf32>
      %cst = arith.constant dense<0.000000e+00> : vector<16x128xf32>
      %22 = tpu.matmul %19, %21, %cst {dimension_numbers = #tpu.dot_dimension_numbers<[1], [0], [0], [1], [0, 0, 1, 1], [], []>} : vector<16x128xf32>, vector<128x128xf32>, vector<16x128xf32> -> vector<16x128xf32>
      %23 = arith.addf %20, %22 : vector<16x128xf32>
      %c0_9 = arith.constant 0 : index
      %c0_10 = arith.constant 0 : index
      %24 = vector.load %arg15[%c0_9, %c0_10] : memref<16x128xf32, #tpu.memory_space<vmem>>, vector<16x128xf32>
      tpu.vector_store %arg15[%c0_9, %c0_10], %23 {strides = array<i32>} : memref<16x128xf32, #tpu.memory_space<vmem>>, vector<16x128xf32>,
    } else {
    }
    %c0_i32_2 = arith.constant 0 : i32
    %8 = arith.cmpi eq, %arg1, %c0_i32_2 : i32
    %9 = arith.extui %8 : i1 to i32
    %c0_i32_3 = arith.constant 0 : i32
    %10 = arith.cmpi ne, %9, %c0_i32_3 : i32
    scf.if %10 {
      %c0 = arith.constant 0 : index
      %c0_4 = arith.constant 0 : index
      %11 = vector.load %arg5[%c0, %c0_4] : memref<16x128xf32, #tpu.memory_space<vmem>>, vector<16x128xf32>
      %c0_5 = arith.constant 0 : index
      %c0_6 = arith.constant 0 : index
      %12 = vector.load %arg15[%c0_5, %c0_6] : memref<16x128xf32, #tpu.memory_space<vmem>>, vector<16x128xf32>
      %c0_7 = arith.constant 0 : index
      %c0_8 = arith.constant 0 : index
      %13 = vector.load %arg7[%c0_7, %c0_8] : memref<128x128xf32, #tpu.memory_space<vmem>>, vector<128x128xf32>
      %cst = arith.constant dense<0.000000e+00> : vector<16x128xf32>
      %14 = tpu.matmul %11, %13, %cst {dimension_numbers = #tpu.dot_dimension_numbers<[1], [0], [0], [1], [0, 0, 1, 1], [], []>} : vector<16x128xf32>, vector<128x128xf32>, vector<16x128xf32> -> vector<16x128xf32>
      %c0_9 = arith.constant 0 : index
      %c0_10 = arith.constant 0 : index
      %15 = vector.load %arg8[%c0_9, %c0_10] : memref<128x128xf32, #tpu.memory_space<vmem>>, vector<128x128xf32>
      %cst_11 = arith.constant dense<0.000000e+00> : vector<16x128xf32>
      %16 = tpu.matmul %12, %15, %cst_11 {dimension_numbers = #tpu.dot_dimension_numbers<[1], [0], [0], [1], [0, 0, 1, 1], [], []>} : vector<16x128xf32>, vector<128x128xf32>, vector<16x128xf32> -> vector<16x128xf32>
      %17 = arith.addf %14, %16 : vector<16x128xf32>
      %c0_12 = arith.constant 0 : index
      %c0_13 = arith.constant 0 : index
      %18 = vector.load %arg9[%c0_12, %c0_13] : memref<1x128xf32, #tpu.memory_space<vmem>>, vector<1x128xf32>
      %19 = vector.broadcast %18 : vector<1x128xf32> to vector<16x128xf32>
      %20 = arith.addf %17, %19 : vector<16x128xf32>
      %21 = arith.negf %20 : vector<16x128xf32>
      %22 = math.exp %21 : vector<16x128xf32>
      %cst_14 = arith.constant 1.000000e+00 : f32
      %23 = vector.broadcast %cst_14 : f32 to vector<16x128xf32>
      %24 = arith.addf %23, %22 : vector<16x128xf32>
      %25 = arith.divf %23, %24 : vector<16x128xf32>
      %26 = arith.mulf %20, %25 : vector<16x128xf32>
      %c0_15 = arith.constant 0 : index
      %c0_16 = arith.constant 0 : index
      %27 = vector.load %arg10[%c0_15, %c0_16] : memref<128x128xf32, #tpu.memory_space<vmem>>, vector<128x128xf32>
      %cst_17 = arith.constant dense<0.000000e+00> : vector<16x128xf32>
      %28 = tpu.matmul %26, %27, %cst_17 {dimension_numbers = #tpu.dot_dimension_numbers<[1], [0], [0], [1], [0, 0, 1, 1], [], []>} : vector<16x128xf32>, vector<128x128xf32>, vector<16x128xf32> -> vector<16x128xf32>
      %c0_18 = arith.constant 0 : index
      %c0_19 = arith.constant 0 : index
      %29 = vector.load %arg11[%c0_18, %c0_19] : memref<1x128xf32, #tpu.memory_space<vmem>>, vector<1x128xf32>
      %30 = vector.broadcast %29 : vector<1x128xf32> to vector<16x128xf32>
      %31 = arith.addf %28, %30 : vector<16x128xf32>
      %32 = tpu.iota {dimensions = array<i32: 1>} : vector<16x128xi32>
      %c16_i32 = arith.constant 16 : i32
      %33 = vector.broadcast %c16_i32 : i32 to vector<16x128xi32>
      %34 = arith.cmpi slt, %32, %33 : vector<16x128xi32>
      %35 = arith.extui %34 : vector<16x128xi1> to vector<16x128xi32>
      %36 = arith.sitofp %35 : vector<16x128xi32> to vector<16x128xf32>
      %37 = arith.mulf %31, %36 : vector<16x128xf32>
      %cst_20 = arith.constant dense<0.000000e+00> : vector<16xf32>
      %38 = vector.multi_reduction <add>, %37, %cst_20 [1] : vector<16x128xf32> to vector<16xf32>
      %39 = vector.shape_cast %38 : vector<16xf32> to vector<16x1xf32>
      %cst_21 = arith.constant 6.250000e-02 : f32
      %40 = vector.broadcast %cst_21 : f32 to vector<16x1xf32>
      %41 = arith.mulf %39, %40 : vector<16x1xf32>
      %42 = vector.broadcast %41 : vector<16x1xf32> to vector<16x128xf32>
      %43 = arith.subf %31, %42 : vector<16x128xf32>
      %44 = arith.mulf %43, %36 : vector<16x128xf32>
      %45 = arith.mulf %44, %44 : vector<16x128xf32>
      %cst_22 = arith.constant dense<0.000000e+00> : vector<16xf32>
      %46 = vector.multi_reduction <add>, %45, %cst_22 [1] : vector<16x128xf32> to vector<16xf32>
      %47 = vector.shape_cast %46 : vector<16xf32> to vector<16x1xf32>
      %cst_23 = arith.constant 6.250000e-02 : f32
      %48 = vector.broadcast %cst_23 : f32 to vector<16x1xf32>
      %49 = arith.mulf %47, %48 : vector<16x1xf32>
      %cst_24 = arith.constant 9.99999974E-6 : f32
      %50 = vector.broadcast %cst_24 : f32 to vector<16x1xf32>
      %51 = arith.addf %49, %50 : vector<16x1xf32>
      %52 = math.rsqrt %51 : vector<16x1xf32>
      %53 = vector.broadcast %52 : vector<16x1xf32> to vector<16x128xf32>
      %54 = arith.mulf %44, %53 : vector<16x128xf32>
      %c0_25 = arith.constant 0 : index
      %c0_26 = arith.constant 0 : index
      %55 = vector.load %arg12[%c0_25, %c0_26] : memref<1x128xf32, #tpu.memory_space<vmem>>, vector<1x128xf32>
      %56 = vector.broadcast %55 : vector<1x128xf32> to vector<16x128xf32>
      %57 = arith.mulf %54, %56 : vector<16x128xf32>
      %c0_27 = arith.constant 0 : index
      %c0_28 = arith.constant 0 : index
      %58 = vector.load %arg13[%c0_27, %c0_28] : memref<1x128xf32, #tpu.memory_space<vmem>>, vector<1x128xf32>
      %59 = vector.broadcast %58 : vector<1x128xf32> to vector<16x128xf32>
      %60 = arith.addf %57, %59 : vector<16x128xf32>
      %61 = arith.addf %60, %11 : vector<16x128xf32>
      %c0_29 = arith.constant 0 : index
      %c0_30 = arith.constant 0 : index
      %62 = vector.load %arg14[%c0_29, %c0_30] : memref<16x128xf32, #tpu.memory_space<vmem>>, vector<16x128xf32>
      tpu.vector_store %arg14[%c0_29, %c0_30], %61 {strides = array<i32>} : memref<16x128xf32, #tpu.memory_space<vmem>>, vector<16x128xf32>,
    } else {
    }
    return
  }
  func.func @transform_0(%arg0: i32, %arg1: i32, %arg2: memref<1xi32, #tpu.memory_space<smem>>, %arg3: memref<1xi32, #tpu.memory_space<smem>>) -> (i32, i32) {
    %0 = arith.index_cast %arg0 : i32 to index
    %1 = memref.load %arg2[%0] : memref<1xi32, #tpu.memory_space<smem>>
    %2 = arith.index_cast %arg0 : i32 to index
    %3 = memref.load %arg3[%2] : memref<1xi32, #tpu.memory_space<smem>>
    %c1_i32 = arith.constant 1 : i32
    %4 = arith.subi %3, %c1_i32 : i32
    %c0_i32 = arith.constant 0 : i32
    %5 = arith.maxsi %4, %c0_i32 : i32
    %6 = arith.addi %1, %5 : i32
    %7 = arith.index_cast %arg0 : i32 to index
    %8 = memref.load %arg2[%7] : memref<1xi32, #tpu.memory_space<smem>>
    %9 = arith.addi %8, %arg1 : i32
    %10 = arith.minsi %9, %6 : i32
    %c0_i32_0 = arith.constant 0 : i32
    %c0_i32_1 = arith.constant 0 : i32
    return %c0_i32_0, %10 : i32, i32
  }
  func.func @transform_1(%arg0: i32, %arg1: i32, %arg2: memref<1xi32, #tpu.memory_space<smem>>, %arg3: memref<1xi32, #tpu.memory_space<smem>>) -> (i32, i32) {
    %c0_i32 = arith.constant 0 : i32
    %c0_i32_0 = arith.constant 0 : i32
    return %arg0, %c0_i32 : i32, i32
  }
  func.func @transform_2(%arg0: i32, %arg1: i32, %arg2: memref<1xi32, #tpu.memory_space<smem>>, %arg3: memref<1xi32, #tpu.memory_space<smem>>) -> (i32, i32) {
    %0 = arith.index_cast %arg0 : i32 to index
    %1 = memref.load %arg2[%0] : memref<1xi32, #tpu.memory_space<smem>>
    %2 = arith.index_cast %arg0 : i32 to index
    %3 = memref.load %arg3[%2] : memref<1xi32, #tpu.memory_space<smem>>
    %c1_i32 = arith.constant 1 : i32
    %4 = arith.subi %3, %c1_i32 : i32
    %c0_i32 = arith.constant 0 : i32
    %5 = arith.maxsi %4, %c0_i32 : i32
    %6 = arith.addi %1, %5 : i32
    %7 = arith.index_cast %arg0 : i32 to index
    %8 = memref.load %arg2[%7] : memref<1xi32, #tpu.memory_space<smem>>
    %9 = arith.addi %8, %arg1 : i32
    %10 = arith.minsi %9, %6 : i32
    %c0_i32_0 = arith.constant 0 : i32
    %c0_i32_1 = arith.constant 0 : i32
    return %10, %c0_i32_0 : i32, i32
  }
  func.func @transform_3(%arg0: i32, %arg1: i32, %arg2: memref<1xi32, #tpu.memory_space<smem>>, %arg3: memref<1xi32, #tpu.memory_space<smem>>) -> (i32, i32) {
    %c0_i32 = arith.constant 0 : i32
    %c0_i32_0 = arith.constant 0 : i32
    %c0_i32_1 = arith.constant 0 : i32
    return %c0_i32, %c0_i32_0 : i32, i32
  }
  func.func @transform_4(%arg0: i32, %arg1: i32, %arg2: memref<1xi32, #tpu.memory_space<smem>>, %arg3: memref<1xi32, #tpu.memory_space<smem>>) -> (i32, i32) {
    %c0_i32 = arith.constant 0 : i32
    %c0_i32_0 = arith.constant 0 : i32
    %c0_i32_1 = arith.constant 0 : i32
    return %c0_i32, %c0_i32_0 : i32, i32
  }
  func.func @transform_5(%arg0: i32, %arg1: i32, %arg2: memref<1xi32, #tpu.memory_space<smem>>, %arg3: memref<1xi32, #tpu.memory_space<smem>>) -> (i32, i32) {
    %c0_i32 = arith.constant 0 : i32
    %c0_i32_0 = arith.constant 0 : i32
    %c0_i32_1 = arith.constant 0 : i32
    return %c0_i32, %c0_i32_0 : i32, i32
  }
  func.func @transform_6(%arg0: i32, %arg1: i32, %arg2: memref<1xi32, #tpu.memory_space<smem>>, %arg3: memref<1xi32, #tpu.memory_space<smem>>) -> (i32, i32) {
    %c0_i32 = arith.constant 0 : i32
    %c0_i32_0 = arith.constant 0 : i32
    %c0_i32_1 = arith.constant 0 : i32
    return %c0_i32, %c0_i32_0 : i32, i32
  }
  func.func @transform_7(%arg0: i32, %arg1: i32, %arg2: memref<1xi32, #tpu.memory_space<smem>>, %arg3: memref<1xi32, #tpu.memory_space<smem>>) -> (i32, i32) {
    %c0_i32 = arith.constant 0 : i32
    %c0_i32_0 = arith.constant 0 : i32
    %c0_i32_1 = arith.constant 0 : i32
    return %c0_i32, %c0_i32_0 : i32, i32
  }
  func.func @transform_8(%arg0: i32, %arg1: i32, %arg2: memref<1xi32, #tpu.memory_space<smem>>, %arg3: memref<1xi32, #tpu.memory_space<smem>>) -> (i32, i32) {
    %c0_i32 = arith.constant 0 : i32
    %c0_i32_0 = arith.constant 0 : i32
    %c0_i32_1 = arith.constant 0 : i32
    return %c0_i32, %c0_i32_0 : i32, i32
  }
  func.func @transform_9(%arg0: i32, %arg1: i32, %arg2: memref<1xi32, #tpu.memory_space<smem>>, %arg3: memref<1xi32, #tpu.memory_space<smem>>) -> (i32, i32) {
    %c0_i32 = arith.constant 0 : i32
    %c0_i32_0 = arith.constant 0 : i32
    %c0_i32_1 = arith.constant 0 : i32
    return %c0_i32, %c0_i32_0 : i32, i32
  }
  func.func @transform_10(%arg0: i32, %arg1: i32, %arg2: memref<1xi32, #tpu.memory_space<smem>>, %arg3: memref<1xi32, #tpu.memory_space<smem>>) -> (i32, i32) {
    %c0_i32 = arith.constant 0 : i32
    %c0_i32_0 = arith.constant 0 : i32
    return %arg0, %c0_i32 : i32, i32
  }
}

</mosaic_0001>

<llo_original>
// kernel: tpu_custom_call.1
$region0: #{tpu_custom_call.1}
  #allocation0 [shape = 'u32[]', space=smem, size = 0x4, offset = 0x4, fixed_abs, tag = 'smem constant byte address 0x4 - core index']
  #allocation1 [shape = 'u32[144,128]{1,0:T(1,128)}', space=vmem, size = 0x12000, scoped, tag = 'internal scratch']
  #allocation2 [shape = 'f32[16,128]{1,0:T(8,128)}', space=vmem, size = 0x2000, scoped, tag = 'scratch operand']
  #allocation3 [shape = 's32[1]{0}', space=sflag, size = 0x4, scoped, tag = 'scoped memory for tpu_custom_call.1']
  #allocation4 [shape = 's32[1]{0:T(128)S(6)}', space=smem, size = 0x200, scoped, tag = 'prefetched SMEM operand 0']
  #allocation5 [shape = 's32[1]{0:T(128)S(6)}', space=smem, size = 0x200, scoped, tag = 'prefetched SMEM operand 1']
  %s0 = inlined_call_operand.<no memory space> [shape: s32[1], index: 0, kind: input, shape index: {}]
  %s1 = inlined_call_operand.<no memory space> [shape: s32[1], index: 1, kind: input, shape index: {}]
  %s2 = inlined_call_operand.vmem [shape: s32[1,128], index: 2, kind: input, shape index: {}]
  %s3 = inlined_call_operand.hbm [shape: f32[16,128], index: 3, kind: input, shape index: {}]
  %s4 = inlined_call_operand.hbm [shape: f32[128,128], index: 4, kind: input, shape index: {}]
  %s5 = inlined_call_operand.hbm [shape: f32[128,128], index: 5, kind: input, shape index: {}]
  %s6 = inlined_call_operand.hbm [shape: f32[128,128], index: 6, kind: input, shape index: {}]
  %s7 = inlined_call_operand.vmem [shape: f32[1,128], index: 7, kind: input, shape index: {}]
  %s8 = inlined_call_operand.hbm [shape: f32[128,128], index: 8, kind: input, shape index: {}]
  %s9 = inlined_call_operand.vmem [shape: f32[1,128], index: 9, kind: input, shape index: {}]
  %s10 = inlined_call_operand.vmem [shape: f32[1,128], index: 10, kind: input, shape index: {}]
  %s11 = inlined_call_operand.vmem [shape: f32[1,128], index: 11, kind: input, shape index: {}]
  %s12 = inlined_call_operand.hbm [shape: f32[16,128], index: 12, kind: output, shape index: {}]
  %s13 = sld [smem:[#allocation0]]
  $region82: #{tpu_custom_call.1} parent=0
    _
  %s15 = ssub.s32 1, %s13
  %s16 = scalar_select 0, %s15, %s13
  %17 = sst [smem:[#allocation4]] %s0
  %18 = sst [smem:[#allocation5]] %s1
  $region1: #{tpu_custom_call.1} parent=0
    #allocation6 [shape = 'u8[8192]{0}', space=vmem, size = 0x2000, scoped, tag = 'input window, operand 3, single buffered']
    #allocation7 [shape = 's32[1]{0}', space=sflag, size = 0x4, scoped, tag = 'scoped memory for tpu_custom_call.1']
    #allocation8 [shape = 's32[1]{0}', space=sflag, size = 0x4, scoped, tag = 'scoped memory for tpu_custom_call.1']
    #allocation9 [shape = 'u8[65536]{0}', space=vmem, size = 0x10000, scoped, tag = 'input window, operand 4, single buffered']
    #allocation10 [shape = 's32[1]{0}', space=sflag, size = 0x4, scoped, tag = 'scoped memory for tpu_custom_call.1']
    #allocation11 [shape = 'u8[65536]{0}', space=vmem, size = 0x10000, scoped, tag = 'input window, operand 5, single buffered']
    #allocation12 [shape = 'u8[65536]{0}', space=vmem, size = 0x10000, scoped, tag = 'input window, operand 6, single buffered']
    #allocation13 [shape = 's32[1]{0}', space=sflag, size = 0x4, scoped, tag = 'scoped memory for tpu_custom_call.1']
    #allocation14 [shape = 'u8[65536]{0}', space=vmem, size = 0x10000, scoped, tag = 'input window, operand 8, single buffered']
    #allocation15 [shape = 'u8[8192]{0}', space=vmem, size = 0x2000, scoped, tag = 'output window, operand 0, single buffered']
    %19 = vsyncpa [#allocation7], 0
    %20 = vsyncpa [#allocation10], 0
    %21 = vsyncpa [#allocation13], 0
    %22 = vsyncpa [#allocation8], 0
    // Predicated region
    $region2: #{tpu_custom_call.1} parent=1 // pred_check
      _
    $region3: #{tpu_custom_call.1} parent=1 // pred_check_branch
      %24 = sbr.rel (0) target = $region5
    $region4: #{tpu_custom_call.1} parent=1 // pred_region
      %s25 = sld [smem:[#allocation4]]
      %s26 = sld [smem:[#allocation5]]
      %s27 = ssub.s32 %s26, 1
      %p28 = scmp.gt.s32.totalorder %s27, 0
      %s29 = scalar_select %p28, %s27, 0
      %s30 = sadd.s32 %s25, %s29
      %s31 = sadd.s32 %s25, 0
      %p32 = scmp.lt.s32.totalorder %s31, %s30
      %s33 = scalar_select %p32, %s31, %s30
      %p34 = scmp.lt.s32.totalorder %s33, 0
      %s35 = scalar_select %p34, %s33, 0
      %s36 = scalar_lea.vmem %s2, %s35
      %s37 = sld [smem:[#allocation4]]
      %s38 = sld [smem:[#allocation5]]
      %s39 = ssub.s32 %s38, 1
      %p40 = scmp.gt.s32.totalorder %s39, 0
      %s41 = scalar_select %p40, %s39, 0
      %s42 = sadd.s32 %s37, %s41
      %s43 = sadd.s32 %s37, 0
      %p44 = scmp.lt.s32.totalorder %s43, %s42
      %s45 = scalar_select %p44, %s43, %s42
    $region5: #{tpu_custom_call.1} parent=1 // pred_fallthru
      _
    // Predicated region
    $region6: #{tpu_custom_call.1} parent=1 // pred_check
      _
    $region7: #{tpu_custom_call.1} parent=1 // pred_check_branch
      %47 = sbr.rel (0) target = $region9
    $region8: #{tpu_custom_call.1} parent=1 // pred_region
      %s49 = ssub.s32 256, 256
      %50 = vsyncadd [#allocation7], %s49
      %s51 = sshll.u32 [#allocation6], 4
      %s52 = int_to_ptr.vmem [resolvable:$true] %s51
      %57 = dma.hbm_to_vmem [thread:$0]  %s3, 256, %s52, [#allocation7], 128, 128, 8
    $region9: #{tpu_custom_call.1} parent=1 // pred_fallthru
      _
    // Predicated region
    $region10: #{tpu_custom_call.1} parent=1 // pred_check
      _
    $region11: #{tpu_custom_call.1} parent=1 // pred_check_branch
      %59 = sbr.rel (0) target = $region13
    $region12: #{tpu_custom_call.1} parent=1 // pred_region
      %s60 = sld [smem:[#allocation4]]
      %s61 = sld [smem:[#allocation5]]
      %s62 = ssub.s32 %s61, 1
      %p63 = scmp.gt.s32.totalorder %s62, 0
      %s64 = scalar_select %p63, %s62, 0
      %s65 = sadd.s32 %s60, %s64
      %s66 = sadd.s32 %s60, 0
      %p67 = scmp.lt.s32.totalorder %s66, %s65
      %s68 = scalar_select %p67, %s66, %s65
      %s69 = smul.u32 16, %s68
      %s71 = ssub.s32 2048, 2048
      %72 = vsyncadd [#allocation10], %s71
      %s73 = smul.addr %s69, 128
      %s74 = scalar_lea.hbm %s4, %s73
      %s75 = sshll.u32 [#allocation9], 4
      %s76 = int_to_ptr.vmem [resolvable:$true] %s75
      %81 = dma.hbm_to_vmem [thread:$0]  %s74, 2048, %s76, [#allocation10], 128, 128, 8
    $region13: #{tpu_custom_call.1} parent=1 // pred_fallthru
      _
    // Predicated region
    $region14: #{tpu_custom_call.1} parent=1 // pred_check
      _
    $region15: #{tpu_custom_call.1} parent=1 // pred_check_branch
      %83 = sbr.rel (0) target = $region17
    $region16: #{tpu_custom_call.1} parent=1 // pred_region
      %s85 = ssub.s32 2048, 2048
      %86 = vsyncadd [#allocation10], %s85
      %s87 = sshll.u32 [#allocation11], 4
      %s88 = int_to_ptr.vmem [resolvable:$true] %s87
      %93 = dma.hbm_to_vmem [thread:$0]  %s5, 2048, %s88, [#allocation10], 128, 128, 8
    $region17: #{tpu_custom_call.1} parent=1 // pred_fallthru
      _
    // Predicated region
    $region18: #{tpu_custom_call.1} parent=1 // pred_check
      _
    $region19: #{tpu_custom_call.1} parent=1 // pred_check_branch
      %95 = sbr.rel (0) target = $region21
    $region20: #{tpu_custom_call.1} parent=1 // pred_region
      %s97 = ssub.s32 2048, 2048
      %98 = vsyncadd [#allocation13], %s97
      %s99 = sshll.u32 [#allocation12], 4
      %s100 = int_to_ptr.vmem [resolvable:$true] %s99
      %105 = dma.hbm_to_vmem [thread:$0]  %s6, 2048, %s100, [#allocation13], 128, 128, 8
    $region21: #{tpu_custom_call.1} parent=1 // pred_fallthru
      _
    // Predicated region
    $region22: #{tpu_custom_call.1} parent=1 // pred_check
      _
    $region23: #{tpu_custom_call.1} parent=1 // pred_check_branch
      %107 = sbr.rel (0) target = $region25
    $region24: #{tpu_custom_call.1} parent=1 // pred_region
      _
    $region25: #{tpu_custom_call.1} parent=1 // pred_fallthru
      _
    // Predicated region
    $region26: #{tpu_custom_call.1} parent=1 // pred_check
      _
    $region27: #{tpu_custom_call.1} parent=1 // pred_check_branch
      %109 = sbr.rel (0) target = $region29
    $region28: #{tpu_custom_call.1} parent=1 // pred_region
      %s111 = ssub.s32 2048, 2048
      %112 = vsyncadd [#allocation13], %s111
      %s113 = sshll.u32 [#allocation14], 4
      %s114 = int_to_ptr.vmem [resolvable:$true] %s113
      %119 = dma.hbm_to_vmem [thread:$0]  %s8, 2048, %s114, [#allocation13], 128, 128, 8
    $region29: #{tpu_custom_call.1} parent=1 // pred_fallthru
      _
    // Predicated region
    $region30: #{tpu_custom_call.1} parent=1 // pred_check
      _
    $region31: #{tpu_custom_call.1} parent=1 // pred_check_branch
      %121 = sbr.rel (0) target = $region33
    $region32: #{tpu_custom_call.1} parent=1 // pred_region
      _
    $region33: #{tpu_custom_call.1} parent=1 // pred_fallthru
      _
    // Predicated region
    $region34: #{tpu_custom_call.1} parent=1 // pred_check
      _
    $region35: #{tpu_custom_call.1} parent=1 // pred_check_branch
      %123 = sbr.rel (0) target = $region37
    $region36: #{tpu_custom_call.1} parent=1 // pred_region
      _
    $region37: #{tpu_custom_call.1} parent=1 // pred_fallthru
      _
    // Predicated region
    $region38: #{tpu_custom_call.1} parent=1 // pred_check
      _
    $region39: #{tpu_custom_call.1} parent=1 // pred_check_branch
      %125 = sbr.rel (0) target = $region41
    $region40: #{tpu_custom_call.1} parent=1 // pred_region
      _
    $region41: #{tpu_custom_call.1} parent=1 // pred_fallthru
      _
    // Predicated region
    $region42: #{tpu_custom_call.1} parent=1 // pred_check
      _
    $region43: #{tpu_custom_call.1} parent=1 // pred_check_branch
      %127 = sbr.rel (0) target = $region45
    $region44: #{tpu_custom_call.1} parent=1 // pred_region
      %128 = dma.done [#allocation7], 256
    $region45: #{tpu_custom_call.1} parent=1 // pred_fallthru
      _
    // Predicated region
    $region46: #{tpu_custom_call.1} parent=1 // pred_check
      _
    $region47: #{tpu_custom_call.1} parent=1 // pred_check_branch
      %130 = sbr.rel (0) target = $region49
    $region48: #{tpu_custom_call.1} parent=1 // pred_region
      %131 = dma.done [#allocation10], 2048
    $region49: #{tpu_custom_call.1} parent=1 // pred_fallthru
      _
    // Predicated region
    $region50: #{tpu_custom_call.1} parent=1 // pred_check
      _
    $region51: #{tpu_custom_call.1} parent=1 // pred_check_branch
      %133 = sbr.rel (0) target = $region53
    $region52: #{tpu_custom_call.1} parent=1 // pred_region
      %134 = dma.done [#allocation10], 2048
    $region53: #{tpu_custom_call.1} parent=1 // pred_fallthru
      _
    // Predicated region
    $region54: #{tpu_custom_call.1} parent=1 // pred_check
      _
    $region55: #{tpu_custom_call.1} parent=1 // pred_check_branch
      %136 = sbr.rel (0) target = $region57
    $region56: #{tpu_custom_call.1} parent=1 // pred_region
      %137 = dma.done [#allocation13], 2048
    $region57: #{tpu_custom_call.1} parent=1 // pred_fallthru
      _
    // Predicated region
    $region58: #{tpu_custom_call.1} parent=1 // pred_check
      _
    $region59: #{tpu_custom_call.1} parent=1 // pred_check_branch
      %139 = sbr.rel (0) target = $region61
    $region60: #{tpu_custom_call.1} parent=1 // pred_region
      %140 = dma.done [#allocation13], 2048
    $region61: #{tpu_custom_call.1} parent=1 // pred_fallthru
      _
    %s141 = sld [smem:[#allocation4]]
    %s142 = sld [smem:[#allocation5]]
    %s143 = ssub.s32 %s142, 1
    %p144 = scmp.gt.s32.totalorder %s143, 0
    %s145 = scalar_select %p144, %s143, 0
    %s146 = sadd.s32 %s141, %s145
    %s147 = sadd.s32 %s141, 0
    %p148 = scmp.lt.s32.totalorder %s147, %s146
    %s149 = scalar_select %p148, %s147, %s146
    %p150 = scmp.lt.s32.totalorder %s149, 0
    %s151 = scalar_select %p150, %s149, 0
    %s152 = scalar_lea.vmem %s2, %s151
    %s153 = sld [smem:[#allocation4]]
    %s154 = sld [smem:[#allocation5]]
    %s155 = ssub.s32 %s154, 1
    %p156 = scmp.gt.s32.totalorder %s155, 0
    %s157 = scalar_select %p156, %s155, 0
    %s158 = sadd.s32 %s153, %s157
    %s159 = sadd.s32 %s153, 0
    %p160 = scmp.lt.s32.totalorder %s159, %s158
    %s161 = scalar_select %p160, %s159, %s158
    %p162 = scmp.lt.s32.totalorder %s161, 0
    %s163 = scalar_select %p162, %s161, 0
    %s164 = scalar_lea.vmem %s2, %s163
    %s165 = sld [smem:[#allocation4]]
    %s166 = sld [smem:[#allocation5]]
    %s167 = ssub.s32 %s166, 1
    %p168 = scmp.gt.s32.totalorder %s167, 0
    %s169 = scalar_select %p168, %s167, 0
    %s170 = sadd.s32 %s165, %s169
    %s171 = sadd.s32 %s165, 0
    %p172 = scmp.lt.s32.totalorder %s171, %s170
    %s173 = scalar_select %p172, %s171, %s170
    %s174 = sld [smem:[#allocation4]]
    %s175 = sld [smem:[#allocation5]]
    %s176 = ssub.s32 %s175, 1
    %p177 = scmp.gt.s32.totalorder %s176, 0
    %s178 = scalar_select %p177, %s176, 0
    %s179 = sadd.s32 %s174, %s178
    %s180 = sadd.s32 %s174, 0
    %p181 = scmp.lt.s32.totalorder %s180, %s179
    %s182 = scalar_select %p181, %s180, %s179
    %s183 = smul.u32 16, %s182
    %p184 = scmp.eq.s32.totalorder 0, 0
    // Predicated region
    $region62: #{tpu_custom_call.1} parent=1 // pred_check
      %p185 = pneg %p184
    $region63: #{tpu_custom_call.1} parent=1 // pred_check_branch
      %187 = sbr.rel (%p185) target = $region65
    $region64: #{tpu_custom_call.1} parent=1 // pred_region
      %188 = vst [vmem:[#allocation2] sm:$0xff] 0.0
      %189 = vst [vmem:[#allocation2 + $0x8] sm:$0xff] 0.0
    $region65: #{tpu_custom_call.1} parent=1 // pred_fallthru
      _
    %s190 = sld [smem:[#allocation5]]
    %p191 = scmp.lt.s32.totalorder 0, %s190
    // Predicated region
    $region66: #{tpu_custom_call.1} parent=1 // pred_check
      %p192 = pneg %p191
    $region67: #{tpu_custom_call.1} parent=1 // pred_check_branch
      %194 = sbr.rel (%p192) target = $region69
    $region68: #{tpu_custom_call.1} parent=1 // pred_region
      %s195 = smul.u32 0, 16
      %v196 = vlaneseq
      %v197 = vshrl.u32 %v196, 7
      %v198 = vadd.s32 %v197, 8
      %v199 = vstv %s195
      %v200 = vadd.s32 %v199, %v197
      %v201 = vadd.s32 %v199, %v198
      %v202 = vld [vmem:[%s164] sm:$0x1]
      %v203 = vlaneseq
      %v204 = vshrl.u32 %v203, 7
      %v205 = vsub.s32 0, %v204
      %v206 = vrot.slane %v202, %v205
      %vm207 = vcmp.eq.s32.totalorder %v200, %v206
      %vm208 = vcmp.eq.s32.totalorder %v201, %v206
      %v209 = vsel %vm207, 1, 0
      %v210 = vsel %vm208, 1, 0
      %v211 = vcvt.s32.f32 %v209
      %v212 = vcvt.s32.f32 %v210
      %v213 = vld [vmem:[#allocation2] sm:$0xff]
      %v214 = vld [vmem:[#allocation2 + $0x8] sm:$0xff]
      %v215 = vld [vmem:[#allocation9] sm:$0xff]
      %v216 = vld [vmem:[#allocation9 + $0x8] sm:$0xff]
      %v217 = vld [vmem:[#allocation9 + $0x10] sm:$0xff]
      %v218 = vld [vmem:[#allocation9 + $0x18] sm:$0xff]
      %v219 = vld [vmem:[#allocation9 + $0x20] sm:$0xff]
      %v220 = vld [vmem:[#allocation9 + $0x28] sm:$0xff]
      %v221 = vld [vmem:[#allocation9 + $0x30] sm:$0xff]
      %v222 = vld [vmem:[#allocation9 + $0x38] sm:$0xff]
      %v223 = vld [vmem:[#allocation9 + $0x40] sm:$0xff]
      %v224 = vld [vmem:[#allocation9 + $0x48] sm:$0xff]
      %v225 = vld [vmem:[#allocation9 + $0x50] sm:$0xff]
      %v226 = vld [vmem:[#allocation9 + $0x58] sm:$0xff]
      %v227 = vld [vmem:[#allocation9 + $0x60] sm:$0xff]
      %v228 = vld [vmem:[#allocation9 + $0x68] sm:$0xff]
      %v229 = vld [vmem:[#allocation9 + $0x70] sm:$0xff]
      %v230 = vld [vmem:[#allocation9 + $0x78] sm:$0xff]
      %231 = vmatprep.subr.mxu0 0.0
      %232 = vmatpush1.msra.mxu0 %v215
      %233 = vmatprep.subr.mxu0 0.0
      %234 = vmatpush1.msra.mxu0 %v216
      %235 = vmatprep.subr.mxu0 0.0
      %236 = vmatpush1.msra.mxu0 %v217
      %237 = vmatprep.subr.mxu0 0.0
      %238 = vmatpush1.msra.mxu0 %v218
      %239 = vmatprep.subr.mxu0 0.0
      %240 = vmatpush1.msra.mxu0 %v219
      %241 = vmatprep.subr.mxu0 0.0
      %242 = vmatpush1.msra.mxu0 %v220
      %243 = vmatprep.subr.mxu0 0.0
      %244 = vmatpush1.msra.mxu0 %v221
      %245 = vmatprep.subr.mxu0 0.0
      %246 = vmatpush1.msra.mxu0 %v222
      %247 = vmatprep.subr.mxu0 0.0
      %248 = vmatpush1.msra.mxu0 %v223
      %249 = vmatprep.subr.mxu0 0.0
      %250 = vmatpush1.msra.mxu0 %v224
      %251 = vmatprep.subr.mxu0 0.0
      %252 = vmatpush1.msra.mxu0 %v225
      %253 = vmatprep.subr.mxu0 0.0
      %254 = vmatpush1.msra.mxu0 %v226
      %255 = vmatprep.subr.mxu0 0.0
      %256 = vmatpush1.msra.mxu0 %v227
      %257 = vmatprep.subr.mxu0 0.0
      %258 = vmatpush1.msra.mxu0 %v228
      %259 = vmatprep.subr.mxu0 0.0
      %260 = vmatpush1.msra.mxu0 %v229
      %261 = vmatprep.subr.mxu0 0.0
      %262 = vmatpush1.msra.mxu0 %v230
      %263 = vmatprep.subr.mxu0 0.0
      %264 = vmatpush1.msra.mxu0 0.0
      %265 = vmatprep.subr.mxu0 0.0
      %266 = vmatpush1.msra.mxu0 0.0
      %267 = vmatprep.subr.mxu0 0.0
      %268 = vmatpush1.msra.mxu0 0.0
      %269 = vmatprep.subr.mxu0 0.0
      %270 = vmatpush1.msra.mxu0 0.0
      %271 = vmatprep.subr.mxu0 0.0
      %272 = vmatpush1.msra.mxu0 0.0
      %273 = vmatprep.subr.mxu0 0.0
      %274 = vmatpush1.msra.mxu0 0.0
      %275 = vmatprep.subr.mxu0 0.0
      %276 = vmatpush1.msra.mxu0 0.0
      %277 = vmatprep.subr.mxu0 0.0
      %278 = vmatpush1.msra.mxu0 0.0
      %279 = vmatprep.subr.mxu0 0.0
      %280 = vmatpush1.msra.mxu0 0.0
      %281 = vmatprep.subr.mxu0 0.0
      %282 = vmatpush1.msra.mxu0 0.0
      %283 = vmatprep.subr.mxu0 0.0
      %284 = vmatpush1.msra.mxu0 0.0
      %285 = vmatprep.subr.mxu0 0.0
      %286 = vmatpush1.msra.mxu0 0.0
      %287 = vmatprep.subr.mxu0 0.0
      %288 = vmatpush1.msra.mxu0 0.0
      %289 = vmatprep.subr.mxu0 0.0
      %290 = vmatpush1.msra.mxu0 0.0
      %291 = vmatprep.subr.mxu0 0.0
      %292 = vmatpush1.msra.mxu0 0.0
      %293 = vmatprep.subr.mxu0 0.0
      %294 = vmatpush1.msra.mxu0 0.0
      %295 = vmatprep.mubr.f32.mxu0 0.0
      %296 = vmatmul.mubr.f32.gmra.mrb[0].mxu0 %v211
      %v297 = vpop.f32.mrb[0].mxu0
      %v298 = vadd.f32 0.0, %v297
      %v299 = vpop.f32.mrb[0].mxu0
      %300 = vmatprep.mubr.f32.mxu0 0.0
      %301 = vmatmul.mubr.f32.gmra.mrb[0].mxu0 %v212
      %v302 = vpop.f32.mrb[0].mxu0
      %v303 = vadd.f32 0.0, %v302
      %v304 = vpop.f32.mrb[0].mxu0
      %305 = vdwg.mxu0
      %v306 = vadd.f32 %v213, %v298
      %v307 = vadd.f32 %v214, %v303
      %308 = vst [vmem:[#allocation2] sm:$0xff] %v306
      %309 = vst [vmem:[#allocation2 + $0x8] sm:$0xff] %v307
    $region69: #{tpu_custom_call.1} parent=1 // pred_fallthru
      _
    // Predicated region
    $region70: #{tpu_custom_call.1} parent=1 // pred_check
      %p310 = pneg %p184
    $region71: #{tpu_custom_call.1} parent=1 // pred_check_branch
      %312 = sbr.rel (%p310) target = $region73
    $region72: #{tpu_custom_call.1} parent=1 // pred_region
      %v313 = vld [vmem:[#allocation6] sm:$0xff]
      %v314 = vld [vmem:[#allocation6 + $0x8] sm:$0xff]
      %v315 = vld [vmem:[#allocation2] sm:$0xff]
      %v316 = vld [vmem:[#allocation2 + $0x8] sm:$0xff]
      %v317 = vld [vmem:[#allocation11] sm:$0xff]
      %v318 = vld [vmem:[#allocation11 + $0x8] sm:$0xff]
      %v319 = vld [vmem:[#allocation11 + $0x10] sm:$0xff]
      %v320 = vld [vmem:[#allocation11 + $0x18] sm:$0xff]
      %v321 = vld [vmem:[#allocation11 + $0x20] sm:$0xff]
      %v322 = vld [vmem:[#allocation11 + $0x28] sm:$0xff]
      %v323 = vld [vmem:[#allocation11 + $0x30] sm:$0xff]
      %v324 = vld [vmem:[#allocation11 + $0x38] sm:$0xff]
      %v325 = vld [vmem:[#allocation11 + $0x40] sm:$0xff]
      %v326 = vld [vmem:[#allocation11 + $0x48] sm:$0xff]
      %v327 = vld [vmem:[#allocation11 + $0x50] sm:$0xff]
      %v328 = vld [vmem:[#allocation11 + $0x58] sm:$0xff]
      %v329 = vld [vmem:[#allocation11 + $0x60] sm:$0xff]
      %v330 = vld [vmem:[#allocation11 + $0x68] sm:$0xff]
      %v331 = vld [vmem:[#allocation11 + $0x70] sm:$0xff]
      %v332 = vld [vmem:[#allocation11 + $0x78] sm:$0xff]
      %v333 = vld [vmem:[#allocation12] sm:$0xff]
      %v334 = vld [vmem:[#allocation12 + $0x8] sm:$0xff]
      %v335 = vld [vmem:[#allocation12 + $0x10] sm:$0xff]
      %v336 = vld [vmem:[#allocation12 + $0x18] sm:$0xff]
      %v337 = vld [vmem:[#allocation12 + $0x20] sm:$0xff]
      %v338 = vld [vmem:[#allocation12 + $0x28] sm:$0xff]
      %v339 = vld [vmem:[#allocation12 + $0x30] sm:$0xff]
      %v340 = vld [vmem:[#allocation12 + $0x38] sm:$0xff]
      %v341 = vld [vmem:[#allocation12 + $0x40] sm:$0xff]
      %v342 = vld [vmem:[#allocation12 + $0x48] sm:$0xff]
      %v343 = vld [vmem:[#allocation12 + $0x50] sm:$0xff]
      %v344 = vld [vmem:[#allocation12 + $0x58] sm:$0xff]
      %v345 = vld [vmem:[#allocation12 + $0x60] sm:$0xff]
      %v346 = vld [vmem:[#allocation12 + $0x68] sm:$0xff]
      %v347 = vld [vmem:[#allocation12 + $0x70] sm:$0xff]
      %v348 = vld [vmem:[#allocation12 + $0x78] sm:$0xff]
      %349 = vmatprep.subr.mxu0 0.0
      %350 = vmatpush1.msra.mxu0 %v333
      %351 = vmatprep.subr.mxu0 0.0
      %352 = vmatpush1.msra.mxu0 %v334
      %353 = vmatprep.subr.mxu0 0.0
      %354 = vmatpush1.msra.mxu0 %v335
      %355 = vmatprep.subr.mxu0 0.0
      %356 = vmatpush1.msra.mxu0 %v336
      %357 = vmatprep.subr.mxu0 0.0
      %358 = vmatpush1.msra.mxu0 %v337
      %359 = vmatprep.subr.mxu0 0.0
      %360 = vmatpush1.msra.mxu0 %v338
      %361 = vmatprep.subr.mxu0 0.0
      %362 = vmatpush1.msra.mxu0 %v339
      %363 = vmatprep.subr.mxu0 0.0
      %364 = vmatpush1.msra.mxu0 %v340
      %365 = vmatprep.subr.mxu0 0.0
      %366 = vmatpush1.msra.mxu0 %v341
      %367 = vmatprep.subr.mxu0 0.0
      %368 = vmatpush1.msra.mxu0 %v342
      %369 = vmatprep.subr.mxu0 0.0
      %370 = vmatpush1.msra.mxu0 %v343
      %371 = vmatprep.subr.mxu0 0.0
      %372 = vmatpush1.msra.mxu0 %v344
      %373 = vmatprep.subr.mxu0 0.0
      %374 = vmatpush1.msra.mxu0 %v345
      %375 = vmatprep.subr.mxu0 0.0
      %376 = vmatpush1.msra.mxu0 %v346
      %377 = vmatprep.subr.mxu0 0.0
      %378 = vmatpush1.msra.mxu0 %v347
      %379 = vmatprep.subr.mxu0 0.0
      %380 = vmatpush1.msra.mxu0 %v348
      %381 = vmatprep.subr.mxu0 0.0
      %382 = vmatpush1.msra.mxu0 0.0
      %383 = vmatprep.subr.mxu0 0.0
      %384 = vmatpush1.msra.mxu0 0.0
      %385 = vmatprep.subr.mxu0 0.0
      %386 = vmatpush1.msra.mxu0 0.0
      %387 = vmatprep.subr.mxu0 0.0
      %388 = vmatpush1.msra.mxu0 0.0
      %389 = vmatprep.subr.mxu0 0.0
      %390 = vmatpush1.msra.mxu0 0.0
      %391 = vmatprep.subr.mxu0 0.0
      %392 = vmatpush1.msra.mxu0 0.0
      %393 = vmatprep.subr.mxu0 0.0
      %394 = vmatpush1.msra.mxu0 0.0
      %395 = vmatprep.subr.mxu0 0.0
      %396 = vmatpush1.msra.mxu0 0.0
      %397 = vmatprep.subr.mxu0 0.0
      %398 = vmatpush1.msra.mxu0 0.0
      %399 = vmatprep.subr.mxu0 0.0
      %400 = vmatpush1.msra.mxu0 0.0
      %401 = vmatprep.subr.mxu0 0.0
      %402 = vmatpush1.msra.mxu0 0.0
      %403 = vmatprep.subr.mxu0 0.0
      %404 = vmatpush1.msra.mxu0 0.0
      %405 = vmatprep.subr.mxu0 0.0
      %406 = vmatpush1.msra.mxu0 0.0
      %407 = vmatprep.subr.mxu0 0.0
      %408 = vmatpush1.msra.mxu0 0.0
      %409 = vmatprep.subr.mxu0 0.0
      %410 = vmatpush1.msra.mxu0 0.0
      %411 = vmatprep.subr.mxu0 0.0
      %412 = vmatpush1.msra.mxu0 0.0
      %413 = vmatprep.mubr.f32.mxu0 0.0
      %414 = vmatmul.mubr.f32.gmra.mrb[0].mxu0 %v315
      %v415 = vpop.f32.mrb[0].mxu0
      %v416 = vadd.f32 0.0, %v415
      %v417 = vpop.f32.mrb[0].mxu0
      %418 = vmatprep.mubr.f32.mxu0 0.0
      %419 = vmatmul.mubr.f32.gmra.mrb[0].mxu0 %v316
      %v420 = vpop.f32.mrb[0].mxu0
      %v421 = vadd.f32 0.0, %v420
      %v422 = vpop.f32.mrb[0].mxu0
      %423 = vdwg.mxu0
      %424 = vmatprep.subr.mxu0 0.0
      %425 = vmatpush1.msra.mxu0 %v317
      %426 = vmatprep.subr.mxu0 0.0
      %427 = vmatpush1.msra.mxu0 %v318
      %428 = vmatprep.subr.mxu0 0.0
      %429 = vmatpush1.msra.mxu0 %v319
      %430 = vmatprep.subr.mxu0 0.0
      %431 = vmatpush1.msra.mxu0 %v320
      %432 = vmatprep.subr.mxu0 0.0
      %433 = vmatpush1.msra.mxu0 %v321
      %434 = vmatprep.subr.mxu0 0.0
      %435 = vmatpush1.msra.mxu0 %v322
      %436 = vmatprep.subr.mxu0 0.0
      %437 = vmatpush1.msra.mxu0 %v323
      %438 = vmatprep.subr.mxu0 0.0
      %439 = vmatpush1.msra.mxu0 %v324
      %440 = vmatprep.subr.mxu0 0.0
      %441 = vmatpush1.msra.mxu0 %v325
      %442 = vmatprep.subr.mxu0 0.0
      %443 = vmatpush1.msra.mxu0 %v326
      %444 = vmatprep.subr.mxu0 0.0
      %445 = vmatpush1.msra.mxu0 %v327
      %446 = vmatprep.subr.mxu0 0.0
      %447 = vmatpush1.msra.mxu0 %v328
      %448 = vmatprep.subr.mxu0 0.0
      %449 = vmatpush1.msra.mxu0 %v329
      %450 = vmatprep.subr.mxu0 0.0
      %451 = vmatpush1.msra.mxu0 %v330
      %452 = vmatprep.subr.mxu0 0.0
      %453 = vmatpush1.msra.mxu0 %v331
      %454 = vmatprep.subr.mxu0 0.0
      %455 = vmatpush1.msra.mxu0 %v332
      %456 = vmatprep.subr.mxu0 0.0
      %457 = vmatpush1.msra.mxu0 0.0
      %458 = vmatprep.subr.mxu0 0.0
      %459 = vmatpush1.msra.mxu0 0.0
      %460 = vmatprep.subr.mxu0 0.0
      %461 = vmatpush1.msra.mxu0 0.0
      %462 = vmatprep.subr.mxu0 0.0
      %463 = vmatpush1.msra.mxu0 0.0
      %464 = vmatprep.subr.mxu0 0.0
      %465 = vmatpush1.msra.mxu0 0.0
      %466 = vmatprep.subr.mxu0 0.0
      %467 = vmatpush1.msra.mxu0 0.0
      %468 = vmatprep.subr.mxu0 0.0
      %469 = vmatpush1.msra.mxu0 0.0
      %470 = vmatprep.subr.mxu0 0.0
      %471 = vmatpush1.msra.mxu0 0.0
      %472 = vmatprep.subr.mxu0 0.0
      %473 = vmatpush1.msra.mxu0 0.0
      %474 = vmatprep.subr.mxu0 0.0
      %475 = vmatpush1.msra.mxu0 0.0
      %476 = vmatprep.subr.mxu0 0.0
      %477 = vmatpush1.msra.mxu0 0.0
      %478 = vmatprep.subr.mxu0 0.0
      %479 = vmatpush1.msra.mxu0 0.0
      %480 = vmatprep.subr.mxu0 0.0
      %481 = vmatpush1.msra.mxu0 0.0
      %482 = vmatprep.subr.mxu0 0.0
      %483 = vmatpush1.msra.mxu0 0.0
      %484 = vmatprep.subr.mxu0 0.0
      %485 = vmatpush1.msra.mxu0 0.0
      %486 = vmatprep.subr.mxu0 0.0
      %487 = vmatpush1.msra.mxu0 0.0
      %488 = vmatprep.mubr.f32.mxu0 0.0
      %489 = vmatmul.mubr.f32.gmra.mrb[0].mxu0 %v313
      %v490 = vpop.f32.mrb[0].mxu0
      %v491 = vadd.f32 %v416, %v490
      %v492 = vpop.f32.mrb[0].mxu0
      %493 = vmatprep.mubr.f32.mxu0 0.0
      %494 = vmatmul.mubr.f32.gmra.mrb[0].mxu0 %v314
      %v495 = vpop.f32.mrb[0].mxu0
      %v496 = vadd.f32 %v421, %v495
      %v497 = vpop.f32.mrb[0].mxu0
      %498 = vdwg.mxu0
      %v499 = vld [vmem:[%s7] sm:$0x1]
      %v501 = vlaneseq
      %v502 = vshrl.u32 %v501, 7
      %v503 = vsub.s32 0, %v502
      %v504 = vrot.slane %v499, %v503
      %v506 = vadd.f32 %v491, %v504
      %v507 = vadd.f32 %v496, %v504
      %v508 = vxor.u32 %v506, 2147483648
      %v509 = vxor.u32 %v507, 2147483648
      %v510 = vmul.f32 %v508, 1.442695
      %v511 = vpow.pop %v510
      %v512 = vmul.f32 %v509, 1.442695
      %v513 = vpow.pop %v512
      %v514 = vadd.f32 %v511, 1.0
      %v515 = vadd.f32 %v513, 1.0
      %v516 = vrcp.pop %v514
      %v517 = vmul.f32 1.0, %v516
      %v518 = vrcp.pop %v515
      %v519 = vmul.f32 1.0, %v518
      %v520 = vmul.f32 %v506, %v517
      %v521 = vmul.f32 %v507, %v519
      %v522 = vld [vmem:[#allocation14] sm:$0xff]
      %v523 = vld [vmem:[#allocation14 + $0x8] sm:$0xff]
      %v524 = vld [vmem:[#allocation14 + $0x10] sm:$0xff]
      %v525 = vld [vmem:[#allocation14 + $0x18] sm:$0xff]
      %v526 = vld [vmem:[#allocation14 + $0x20] sm:$0xff]
      %v527 = vld [vmem:[#allocation14 + $0x28] sm:$0xff]
      %v528 = vld [vmem:[#allocation14 + $0x30] sm:$0xff]
      %v529 = vld [vmem:[#allocation14 + $0x38] sm:$0xff]
      %v530 = vld [vmem:[#allocation14 + $0x40] sm:$0xff]
      %v531 = vld [vmem:[#allocation14 + $0x48] sm:$0xff]
      %v532 = vld [vmem:[#allocation14 + $0x50] sm:$0xff]
      %v533 = vld [vmem:[#allocation14 + $0x58] sm:$0xff]
      %v534 = vld [vmem:[#allocation14 + $0x60] sm:$0xff]
      %v535 = vld [vmem:[#allocation14 + $0x68] sm:$0xff]
      %v536 = vld [vmem:[#allocation14 + $0x70] sm:$0xff]
      %v537 = vld [vmem:[#allocation14 + $0x78] sm:$0xff]
      %v538 = vld [vmem:[%s9] sm:$0x1]
      %v540 = vlaneseq
      %v541 = vshrl.u32 %v540, 7
      %v542 = vsub.s32 0, %v541
      %v543 = vrot.slane %v538, %v542
      %545 = vmatprep.subr.mxu0 0.0
      %546 = vmatpush1.msra.mxu0 %v522
      %547 = vmatprep.subr.mxu0 0.0
      %548 = vmatpush1.msra.mxu0 %v523
      %549 = vmatprep.subr.mxu0 0.0
      %550 = vmatpush1.msra.mxu0 %v524
      %551 = vmatprep.subr.mxu0 0.0
      %552 = vmatpush1.msra.mxu0 %v525
      %553 = vmatprep.subr.mxu0 0.0
      %554 = vmatpush1.msra.mxu0 %v526
      %555 = vmatprep.subr.mxu0 0.0
      %556 = vmatpush1.msra.mxu0 %v527
      %557 = vmatprep.subr.mxu0 0.0
      %558 = vmatpush1.msra.mxu0 %v528
      %559 = vmatprep.subr.mxu0 0.0
      %560 = vmatpush1.msra.mxu0 %v529
      %561 = vmatprep.subr.mxu0 0.0
      %562 = vmatpush1.msra.mxu0 %v530
      %563 = vmatprep.subr.mxu0 0.0
      %564 = vmatpush1.msra.mxu0 %v531
      %565 = vmatprep.subr.mxu0 0.0
      %566 = vmatpush1.msra.mxu0 %v532
      %567 = vmatprep.subr.mxu0 0.0
      %568 = vmatpush1.msra.mxu0 %v533
      %569 = vmatprep.subr.mxu0 0.0
      %570 = vmatpush1.msra.mxu0 %v534
      %571 = vmatprep.subr.mxu0 0.0
      %572 = vmatpush1.msra.mxu0 %v535
      %573 = vmatprep.subr.mxu0 0.0
      %574 = vmatpush1.msra.mxu0 %v536
      %575 = vmatprep.subr.mxu0 0.0
      %576 = vmatpush1.msra.mxu0 %v537
      %577 = vmatprep.subr.mxu0 0.0
      %578 = vmatpush1.msra.mxu0 0.0
      %579 = vmatprep.subr.mxu0 0.0
      %580 = vmatpush1.msra.mxu0 0.0
      %581 = vmatprep.subr.mxu0 0.0
      %582 = vmatpush1.msra.mxu0 0.0
      %583 = vmatprep.subr.mxu0 0.0
      %584 = vmatpush1.msra.mxu0 0.0
      %585 = vmatprep.subr.mxu0 0.0
      %586 = vmatpush1.msra.mxu0 0.0
      %587 = vmatprep.subr.mxu0 0.0
      %588 = vmatpush1.msra.mxu0 0.0
      %589 = vmatprep.subr.mxu0 0.0
      %590 = vmatpush1.msra.mxu0 0.0
      %591 = vmatprep.subr.mxu0 0.0
      %592 = vmatpush1.msra.mxu0 0.0
      %593 = vmatprep.subr.mxu0 0.0
      %594 = vmatpush1.msra.mxu0 0.0
      %595 = vmatprep.subr.mxu0 0.0
      %596 = vmatpush1.msra.mxu0 0.0
      %597 = vmatprep.subr.mxu0 0.0
      %598 = vmatpush1.msra.mxu0 0.0
      %599 = vmatprep.subr.mxu0 0.0
      %600 = vmatpush1.msra.mxu0 0.0
      %601 = vmatprep.subr.mxu0 0.0
      %602 = vmatpush1.msra.mxu0 0.0
      %603 = vmatprep.subr.mxu0 0.0
      %604 = vmatpush1.msra.mxu0 0.0
      %605 = vmatprep.subr.mxu0 0.0
      %606 = vmatpush1.msra.mxu0 0.0
      %607 = vmatprep.subr.mxu0 0.0
      %608 = vmatpush1.msra.mxu0 0.0
      %609 = vmatprep.mubr.f32.mxu0 0.0
      %610 = vmatmul.mubr.f32.gmra.mrb[0].mxu0 %v520
      %v611 = vpop.f32.mrb[0].mxu0
      %v612 = vadd.f32 %v543, %v611
      %v613 = vpop.f32.mrb[0].mxu0
      %614 = vmatprep.mubr.f32.mxu0 0.0
      %615 = vmatmul.mubr.f32.gmra.mrb[0].mxu0 %v521
      %v616 = vpop.f32.mrb[0].mxu0
      %v617 = vadd.f32 %v543, %v616
      %v618 = vpop.f32.mrb[0].mxu0
      %619 = vdwg.mxu0
      %v620 = vlaneseq
      %v621 = vand.u32 %v620, 127
      %vm622 = vcmp.lt.s32.totalorder %v621, 16
      %v623 = vsel %vm622, 1, 0
      %v624 = vcvt.s32.f32 %v623
      %v625 = vmul.f32 %v612, %v624
      %v626 = vmul.f32 %v617, %v624
      %627 = vadd.xlane.f32.xlu0 %v625
      %v628 = vpop.xlane.xlu0 %627
      %629 = vadd.xlane.f32.xlu0 %v626
      %v630 = vpop.xlane.xlu0 %629
      %v631 = vmul.f32 %v628, 0.0625
      %v632 = vmul.f32 %v630, 0.0625
      %v633 = vsub.f32 %v612, %v631
      %v634 = vsub.f32 %v617, %v632
      %v635 = vmul.f32 %v633, %v624
      %v636 = vmul.f32 %v634, %v624
      %v637 = vmul.f32 %v635, %v635
      %v638 = vmul.f32 %v636, %v636
      %639 = vadd.xlane.f32.xlu0 %v637
      %v640 = vpop.xlane.xlu0 %639
      %641 = vadd.xlane.f32.xlu0 %v638
      %v642 = vpop.xlane.xlu0 %641
      %v643 = vmul.f32 %v640, 0.0625
      %v644 = vmul.f32 %v642, 0.0625
      %v645 = vadd.f32 %v643, 1e-05
      %v646 = vadd.f32 %v644, 1e-05
      %v647 = vrsqrt.pop %v645
      %v648 = vrsqrt.pop %v646
      %v649 = vmul.f32 %v635, %v647
      %v650 = vmul.f32 %v636, %v648
      %v651 = vld [vmem:[%s10] sm:$0x1]
      %v653 = vlaneseq
      %v654 = vshrl.u32 %v653, 7
      %v655 = vsub.s32 0, %v654
      %v656 = vrot.slane %v651, %v655
      %v658 = vmul.f32 %v649, %v656
      %v659 = vmul.f32 %v650, %v656
      %v660 = vld [vmem:[%s11] sm:$0x1]
      %v662 = vlaneseq
      %v663 = vshrl.u32 %v662, 7
      %v664 = vsub.s32 0, %v663
      %v665 = vrot.slane %v660, %v664
      %v667 = vadd.f32 %v658, %v665
      %v668 = vadd.f32 %v659, %v665
      %v669 = vadd.f32 %v667, %v313
      %v670 = vadd.f32 %v668, %v314
      %671 = vst [vmem:[#allocation15] sm:$0xff] %v669
      %672 = vst [vmem:[#allocation15 + $0x8] sm:$0xff] %v670
    $region73: #{tpu_custom_call.1} parent=1 // pred_fallthru
      _
    // Predicated region
    $region74: #{tpu_custom_call.1} parent=1 // pred_check
      _
    $region75: #{tpu_custom_call.1} parent=1 // pred_check_branch
      %674 = sbr.rel (0) target = $region77
    $region76: #{tpu_custom_call.1} parent=1 // pred_region
      %s676 = ssub.s32 256, 256
      %677 = vsyncadd [#allocation8], %s676
      %s678 = sshll.u32 [#allocation15], 4
      %s679 = int_to_ptr.vmem [resolvable:$true] %s678
      %684 = dma.vmem_to_hbm [thread:$0]  %s679, 256, %s12, [#allocation8], 128, 128, 8
    $region77: #{tpu_custom_call.1} parent=1 // pred_fallthru
      _
    // Predicated region
    $region78: #{tpu_custom_call.1} parent=1 // pred_check
      _
    $region79: #{tpu_custom_call.1} parent=1 // pred_check_branch
      %686 = sbr.rel (0) target = $region81
    $region80: #{tpu_custom_call.1} parent=1 // pred_region
      %687 = dma.done [#allocation8], 256
    $region81: #{tpu_custom_call.1} parent=1 // pred_fallthru
      _
    %688 = vsyncpa [#allocation7], 1
    %689 = vsyncpa [#allocation10], 1
    %690 = vsyncpa [#allocation13], 1
    %691 = vsyncpa [#allocation8], 1

</llo_original>
